<compile_context>
chip_gen: v5e
topology: v5e:2x2
jax: 0.10.0
libtpu: 0.0.40
codegen_flags: <defaults>
</compile_context>

<pallas_src>
import jax
import jax.numpy as jnp
from jax.experimental import pallas as pl
from jax.experimental.pallas import tpu as pltpu


# ----------------------------- small helpers --------------------------------
def _round_up(x, m):
    return ((x + m - 1) // m) * m


def _cdiv(a, b):
    return -(-a // b)


def _vmem_capacity_bytes():
    """Physical VMEM per TensorCore (conservative v7x default if unknown)."""
    try:
        info = pltpu.get_tpu_info()
        cap = getattr(info, "vmem_capacity_bytes", None)
        if cap:
            return int(cap)
    except Exception:
        pass
    return 64 << 20  # assume v7x-sized VMEM if we cannot query


def _pick_tile(dim, align, cap):
    """Tile size (multiple of `align`, <= cap) that minimizes padding.

    If the align-rounded dim already fits under the cap, use it directly
    (single tile, zero extra padding). Otherwise search tiles in
    [cap/2, cap] and pick the one with the least padding (largest on ties).
    """
    dp = _round_up(dim, align)
    cap = max(align, (cap // align) * align)
    if dp <= cap:
        return dp
    lo = max(align, (cap // 2 // align) * align)
    best_t, best_pad = cap, _round_up(dp, cap) - dp
    t = cap - align
    while t >= lo and best_pad > 0:
        pad = _round_up(dp, t) - dp
        if pad < best_pad:
            best_pad, best_t = pad, t
        t -= align
    return best_t


def _ws_bytes(tm, tk, tn, in_bytes, out_bytes=4):
    """Double-buffered x/W tiles + double-buffered f32 out tile + bias row."""
    return (2 * (tm * tk + tk * tn) * in_bytes
            + 2 * tm * tn * out_bytes
            + 2 * tn * out_bytes)


# ------------------------------- kernels -------------------------------------
def _linear_kernel_single_k(x_ref, wt_ref, b_ref, o_ref):
    """o = x @ W^T + b when K fits in a single tile (no accumulation loop)."""
    o_ref[...] = (jnp.dot(x_ref[...], wt_ref[...],
                          preferred_element_type=jnp.float32)
                  + b_ref[...]).astype(o_ref.dtype)


def _linear_kernel_k_accum(x_ref, wt_ref, b_ref, o_ref):
    """K-tiled matmul accumulating directly into the VMEM-resident o tile."""
    k = pl.program_id(2)

    @pl.when(k == 0)
    def _init():
        o_ref[...] = jnp.zeros_like(o_ref)

    o_ref[...] += jnp.dot(x_ref[...], wt_ref[...],
                          preferred_element_type=jnp.float32)

    @pl.when(k == pl.num_programs(2) - 1)
    def _bias():
        o_ref[...] += b_ref[...]


# ------------------------------- wrapper --------------------------------------
def logistic_r_forward(x, weight_t, bias, *, param_dtype=None,
                       tm_cap=None, tn_cap=None, tk_cap=None):
    """Pallas implementation of LogisticR.forward (== nn.Linear).

    x:        (M, K) float32
    weight_t: (K, N) float32  -- PyTorch weight (N, K) transposed ONCE at init.
    bias:     (N,)   float32
    returns   (M, N) float32  == x @ W^T + b

    param_dtype: optionally stream x/W as bf16 (halves weight DMA; accumulation,
    bias and output stay f32). Default None keeps full f32 for exact parity.
    """
    M, K = x.shape
    K2, N = weight_t.shape
    assert K == K2 and bias.shape == (N,)

    if param_dtype is not None:
        x = x.astype(param_dtype)
        weight_t = weight_t.astype(param_dtype)
    in_bytes = jnp.dtype(x.dtype).itemsize
    out_dtype = jnp.float32

    # Generation-aware caps and budgets.
    vmem_cap = _vmem_capacity_bytes()
    big_vmem = vmem_cap >= (100 << 20)          # v5e/v6e: 128 MiB, v7x: 64 MiB
    if tm_cap is None:
        tm_cap = 512
    if tn_cap is None:
        tn_cap = 1024 if big_vmem else 512
    if tk_cap is None:
        tk_cap = 2048 if big_vmem else 1024
    ws_budget = vmem_cap // 2 - (4 << 20)        # ~28 MiB v7x, ~60 MiB v5e/v6e

    # Padding-aware tile selection.
    tm = _pick_tile(M, 8, tm_cap)
    tn = _pick_tile(N, 128, tn_cap)
    tk = _pick_tile(K, 128, tk_cap)

    # Weight-resident fast path: whole (Kp, Np) weight as a single block with a
    # constant index map => DMA'd exactly once, reused for every M tile.
    Kp_full, Np_full = _round_up(K, 128), _round_up(N, 128)
    if (Kp_full * Np_full * in_bytes <= (8 << 20)
            and _ws_bytes(tm, Kp_full, Np_full, in_bytes) <= ws_budget):
        tk, tn = Kp_full, Np_full

    # Shrink (K first, then N, then M) until the working set fits the budget.
    while _ws_bytes(tm, tk, tn, in_bytes) > ws_budget:
        if tk > 128:
            tk = _round_up(tk // 2, 128)
        elif tn > 128:
            tn = _round_up(tn // 2, 128)
        elif tm > 8:
            tm = _round_up(tm // 2, 8)
        else:
            break

    # Megacore (v7x has 2 TensorCores): ensure >= 2 tiles on a "parallel" axis
    # when the batch is big enough; costs ~one extra grid step on 1-TC chips.
    if _cdiv(M, tm) * _cdiv(N, tn) == 1 and _round_up(M, 8) >= 16:
        tm = _round_up(_cdiv(M, 2), 8)

    grid_m, grid_n, grid_k = _cdiv(M, tm), _cdiv(N, tn), _cdiv(K, tk)
    Mp, Np, Kp = grid_m * tm, grid_n * tn, grid_k * tk

    xp = x if (Mp == M and Kp == K) else jnp.pad(x, ((0, Mp - M), (0, Kp - K)))
    wtp = (weight_t if (Kp == K and Np == N)
           else jnp.pad(weight_t, ((0, Kp - K), (0, Np - N))))
    bp = (bias if Np == N else jnp.pad(bias, (0, Np - N))).reshape(1, Np)

    ws = _ws_bytes(tm, tk, tn, in_bytes)
    vmem_limit = int(min(vmem_cap * 3 // 4, max(32 << 20, ws + (8 << 20))))

    # Refetch-aware (approximate) byte count for the scheduler hint.
    x_bytes = grid_n * Mp * Kp * in_bytes
    w_fetches = 1 if (grid_n == 1 and grid_k == 1) else grid_m
    w_bytes = w_fetches * Kp * Np * in_bytes
    cost = pl.CostEstimate(
        flops=2 * Mp * Np * Kp,
        bytes_accessed=x_bytes + w_bytes + 4 * (Mp * Np + Np),
        transcendentals=0)

    if grid_k == 1:
        # Common case: single K tile -> 2-D grid, no init/epilogue branches.
        out = pl.pallas_call(
            _linear_kernel_single_k,
            out_shape=jax.ShapeDtypeStruct((Mp, Np), out_dtype),
            grid=(grid_m, grid_n),
            in_specs=[
                pl.BlockSpec((tm, tk), lambda i, j: (i, 0)),   # x tile
                pl.BlockSpec((tk, tn), lambda i, j: (0, j)),   # W^T tile
                pl.BlockSpec((1, tn), lambda i, j: (0, j)),    # bias row
            ],
            out_specs=pl.BlockSpec((tm, tn), lambda i, j: (i, j)),
            compiler_params=pltpu.CompilerParams(
                dimension_semantics=("parallel", "parallel"),
                vmem_limit_bytes=vmem_limit),
            cost_estimate=cost,
        )(xp, wtp, bp)
    else:
        out = pl.pallas_call(
            _linear_kernel_k_accum,
            out_shape=jax.ShapeDtypeStruct((Mp, Np), out_dtype),
            grid=(grid_m, grid_n, grid_k),
            in_specs=[
                pl.BlockSpec((tm, tk), lambda i, j, k: (i, k)),  # x tile
                pl.BlockSpec((tk, tn), lambda i, j, k: (k, j)),  # W^T tile
                pl.BlockSpec((1, tn), lambda i, j, k: (0, j)),   # bias row
            ],
            out_specs=pl.BlockSpec((tm, tn), lambda i, j, k: (i, j)),
            compiler_params=pltpu.CompilerParams(
                dimension_semantics=("parallel", "parallel", "arbitrary"),
                vmem_limit_bytes=vmem_limit),
            cost_estimate=cost,
        )(xp, wtp, bp)

    if Mp != M or Np != N:
        out = out[:M, :N]
    return out.astype(jnp.float32)


def init_logistic_r_params(key, input_dim, output_dim):
    """PyTorch-style init U(-1/sqrt(in), 1/sqrt(in)).

    Returns the weight already transposed to (input_dim, output_dim) so the
    forward pass does zero per-call HBM transposes.
    """
    kw, kb = jax.random.split(key)
    bound = 1.0 / jnp.sqrt(jnp.float32(input_dim))
    weight = jax.random.uniform(
        kw, (output_dim, input_dim), jnp.float32, minval=-bound, maxval=bound)
    bias = jax.random.uniform(
        kb, (output_dim,), jnp.float32, minval=-bound, maxval=bound)
    weight_t = weight.T  # transpose ONCE here, store (K, N)
    return weight_t, bias


if __name__ == "__main__":
    key = jax.random.PRNGKey(0)
    kx, kp, kx2, kp2 = jax.random.split(key, 4)

    # Small shape matching the original module demo (nn.Linear forward).
    batch, input_dim, output_dim = 8, 32, 16
    x = jax.random.normal(kx, (batch, input_dim), jnp.float32)
    weight_t, bias = init_logistic_r_params(kp, input_dim, output_dim)

    out = logistic_r_forward(x, weight_t, bias)
    out = jax.block_until_ready(out)
    ref = x @ weight_t + bias
    assert out.shape == (batch, output_dim)
    assert jnp.allclose(out, ref, atol=1e-5, rtol=1e-5)

    # Second, non-aligned shape exercising multi-tile grid, the weight-resident
    # path and the minimal-padding tile selection (272x640x200 now pads only
    # N: 200 -> 256, instead of the previous 512x1024x256).
    M2, K2, N2 = 272, 640, 200
    x2 = jax.random.normal(kx2, (M2, K2), jnp.float32)
    wt2, b2 = init_logistic_r_params(kp2, K2, N2)
    out2 = jax.block_until_ready(logistic_r_forward(x2, wt2, b2))
    ref2 = x2 @ wt2 + b2
    assert out2.shape == (M2, N2)
    assert jnp.allclose(out2, ref2, atol=1e-4, rtol=1e-4)

    print("KERNEL_OK")
</pallas_src>

<mosaic_0001>
module attributes {stable_mosaic.version = 11 : i64} {
  func.func @_linear_kernel_single_k(%arg0: i32, %arg1: i32, %arg2: memref<8x128xf32, #tpu.memory_space<vmem>>, %arg3: memref<128x128xf32, #tpu.memory_space<vmem>>, %arg4: memref<1x128xf32, #tpu.memory_space<vmem>>, %arg5: memref<8x128xf32, #tpu.memory_space<vmem>>) attributes {dimension_semantics = [#tpu.dimension_semantics<parallel>, #tpu.dimension_semantics<parallel>], iteration_bounds = array<i64: 1, 1>, scalar_prefetch = 0 : i64, scratch_operands = 0 : i64, tpu.core_type = #tpu.core_type<tc>, window_params = [{transform_indices = @transform_0, window_bounds = array<i64: 8, 128>}, {transform_indices = @transform_1, window_bounds = array<i64: 128, 128>}, {transform_indices = @transform_2, window_bounds = array<i64: 1, 128>}, {transform_indices = @transform_3, window_bounds = array<i64: 8, 128>}]} {
    %c0 = arith.constant 0 : index
    %c0_0 = arith.constant 0 : index
    %0 = vector.load %arg2[%c0, %c0_0] : memref<8x128xf32, #tpu.memory_space<vmem>>, vector<8x128xf32>
    %c0_1 = arith.constant 0 : index
    %c0_2 = arith.constant 0 : index
    %1 = vector.load %arg3[%c0_1, %c0_2] : memref<128x128xf32, #tpu.memory_space<vmem>>, vector<128x128xf32>
    %cst = arith.constant dense<0.000000e+00> : vector<8x128xf32>
    %2 = tpu.matmul %0, %1, %cst {dimension_numbers = #tpu.dot_dimension_numbers<[1], [0], [0], [1], [0, 0, 1, 1], [], []>} : vector<8x128xf32>, vector<128x128xf32>, vector<8x128xf32> -> vector<8x128xf32>
    %c0_3 = arith.constant 0 : index
    %c0_4 = arith.constant 0 : index
    %3 = vector.load %arg4[%c0_3, %c0_4] : memref<1x128xf32, #tpu.memory_space<vmem>>, vector<1x128xf32>
    %4 = vector.broadcast %3 : vector<1x128xf32> to vector<8x128xf32>
    %5 = arith.addf %2, %4 : vector<8x128xf32>
    %c0_5 = arith.constant 0 : index
    %c0_6 = arith.constant 0 : index
    %6 = vector.load %arg5[%c0_5, %c0_6] : memref<8x128xf32, #tpu.memory_space<vmem>>, vector<8x128xf32>
    tpu.vector_store %arg5[%c0_5, %c0_6], %5 {strides = array<i32>} : memref<8x128xf32, #tpu.memory_space<vmem>>, vector<8x128xf32>,
    return
  }
  func.func @transform_0(%arg0: i32, %arg1: i32) -> (i32, i32) {
    %c0_i32 = arith.constant 0 : i32
    %c0_i32_0 = arith.constant 0 : i32
    return %arg0, %c0_i32 : i32, i32
  }
  func.func @transform_1(%arg0: i32, %arg1: i32) -> (i32, i32) {
    %c0_i32 = arith.constant 0 : i32
    %c0_i32_0 = arith.constant 0 : i32
    return %c0_i32, %arg1 : i32, i32
  }
  func.func @transform_2(%arg0: i32, %arg1: i32) -> (i32, i32) {
    %c0_i32 = arith.constant 0 : i32
    %c0_i32_0 = arith.constant 0 : i32
    return %c0_i32, %arg1 : i32, i32
  }
  func.func @transform_3(%arg0: i32, %arg1: i32) -> (i32, i32) {
    %c0_i32 = arith.constant 0 : i32
    return %arg0, %arg1 : i32, i32
  }
}

</mosaic_0001>

<llo_original>
// kernel: tpu_custom_call.1
$region0: #{tpu_custom_call.1}
  #allocation0 [shape = 'u32[]', space=smem, size = 0x4, offset = 0x4, fixed_abs, tag = 'smem constant byte address 0x4 - core index']
  #allocation1 [shape = 'u32[72,128]{1,0:T(1,128)}', space=vmem, size = 0x9000, scoped, tag = 'internal scratch']
  %s0 = inlined_call_operand.hbm [shape: f32[8,128], index: 0, kind: input, shape index: {}]
  %s1 = inlined_call_operand.hbm [shape: f32[128,128], index: 1, kind: input, shape index: {}]
  %s2 = inlined_call_operand.vmem [shape: f32[1,128], index: 2, kind: input, shape index: {}]
  %s3 = inlined_call_operand.hbm [shape: f32[8,128], index: 3, kind: output, shape index: {}]
  %s4 = sld [smem:[#allocation0]]
  $region30: #{tpu_custom_call.1} parent=0
    _
  %s6 = ssub.s32 1, %s4
  %s7 = scalar_select 0, %s6, %s4
  $region1: #{tpu_custom_call.1} parent=0
    #allocation2 [shape = 'u8[4096]{0}', space=vmem, size = 0x1000, scoped, tag = 'input window, operand 0, single buffered']
    #allocation3 [shape = 's32[1]{0}', space=sflag, size = 0x4, scoped, tag = 'scoped memory for tpu_custom_call.1']
    #allocation4 [shape = 's32[1]{0}', space=sflag, size = 0x4, scoped, tag = 'scoped memory for tpu_custom_call.1']
    #allocation5 [shape = 'u8[65536]{0}', space=vmem, size = 0x10000, scoped, tag = 'input window, operand 1, single buffered']
    #allocation6 [shape = 's32[1]{0}', space=sflag, size = 0x4, scoped, tag = 'scoped memory for tpu_custom_call.1']
    #allocation7 [shape = 'u8[4096]{0}', space=vmem, size = 0x1000, scoped, tag = 'output window, operand 0, single buffered']
    %8 = vsyncpa [#allocation3], 0
    %9 = vsyncpa [#allocation6], 0
    %10 = vsyncpa [#allocation4], 0
    // Predicated region
    $region2: #{tpu_custom_call.1} parent=1 // pred_check
      _
    $region3: #{tpu_custom_call.1} parent=1 // pred_check_branch
      %12 = sbr.rel (0) target = $region5
    $region4: #{tpu_custom_call.1} parent=1 // pred_region
      %14 = vsyncadd [#allocation3], 0
      %s16 = sshll.u32 %s0, 4
      %s17 = int_to_ptr.hbm [resolvable:$true] %s16
      %s18 = sshll.u32 [#allocation2], 4
      %s19 = int_to_ptr.vmem [resolvable:$true] %s18
      %21 = dma.hbm_to_vmem [thread:$0]  %s17, 128, %s19, [#allocation3]
    $region5: #{tpu_custom_call.1} parent=1 // pred_fallthru
      _
    // Predicated region
    $region6: #{tpu_custom_call.1} parent=1 // pred_check
      _
    $region7: #{tpu_custom_call.1} parent=1 // pred_check_branch
      %23 = sbr.rel (0) target = $region9
    $region8: #{tpu_custom_call.1} parent=1 // pred_region
      %25 = vsyncadd [#allocation6], 0
      %s26 = sshll.u32 %s1, 4
      %s27 = int_to_ptr.hbm [resolvable:$true] %s26
      %s28 = sshll.u32 [#allocation5], 4
      %s29 = int_to_ptr.vmem [resolvable:$true] %s28
      %34 = dma.hbm_to_vmem [thread:$0]  %s27, 2048, %s29, [#allocation6], 128, 128, 8
    $region9: #{tpu_custom_call.1} parent=1 // pred_fallthru
      _
    // Predicated region
    $region10: #{tpu_custom_call.1} parent=1 // pred_check
      _
    $region11: #{tpu_custom_call.1} parent=1 // pred_check_branch
      %36 = sbr.rel (0) target = $region13
    $region12: #{tpu_custom_call.1} parent=1 // pred_region
      _
    $region13: #{tpu_custom_call.1} parent=1 // pred_fallthru
      _
    // Predicated region
    $region14: #{tpu_custom_call.1} parent=1 // pred_check
      _
    $region15: #{tpu_custom_call.1} parent=1 // pred_check_branch
      %38 = sbr.rel (0) target = $region17
    $region16: #{tpu_custom_call.1} parent=1 // pred_region
      %40 = dma.done [#allocation3], 128
    $region17: #{tpu_custom_call.1} parent=1 // pred_fallthru
      _
    // Predicated region
    $region18: #{tpu_custom_call.1} parent=1 // pred_check
      _
    $region19: #{tpu_custom_call.1} parent=1 // pred_check_branch
      %42 = sbr.rel (0) target = $region21
    $region20: #{tpu_custom_call.1} parent=1 // pred_region
      %44 = dma.done [#allocation6], 2048
    $region21: #{tpu_custom_call.1} parent=1 // pred_fallthru
      _
    %v45 = vld [vmem:[#allocation2] sm:$0xff]
    %v46 = vld [vmem:[#allocation5] sm:$0xff]
    %v47 = vld [vmem:[#allocation5 + $0x8] sm:$0xff]
    %v48 = vld [vmem:[#allocation5 + $0x10] sm:$0xff]
    %v49 = vld [vmem:[#allocation5 + $0x18] sm:$0xff]
    %v50 = vld [vmem:[#allocation5 + $0x20] sm:$0xff]
    %v51 = vld [vmem:[#allocation5 + $0x28] sm:$0xff]
    %v52 = vld [vmem:[#allocation5 + $0x30] sm:$0xff]
    %v53 = vld [vmem:[#allocation5 + $0x38] sm:$0xff]
    %v54 = vld [vmem:[#allocation5 + $0x40] sm:$0xff]
    %v55 = vld [vmem:[#allocation5 + $0x48] sm:$0xff]
    %v56 = vld [vmem:[#allocation5 + $0x50] sm:$0xff]
    %v57 = vld [vmem:[#allocation5 + $0x58] sm:$0xff]
    %v58 = vld [vmem:[#allocation5 + $0x60] sm:$0xff]
    %v59 = vld [vmem:[#allocation5 + $0x68] sm:$0xff]
    %v60 = vld [vmem:[#allocation5 + $0x70] sm:$0xff]
    %v61 = vld [vmem:[#allocation5 + $0x78] sm:$0xff]
    %v62 = vld [vmem:[%s2] sm:$0x1]
    %v64 = vperm.slane %v62, 0
    %66 = vmatpush.msra.mxu0 %v61
    %67 = vmatpush.msra.mxu0 %v60
    %68 = vmatpush.msra.mxu0 %v59
    %69 = vmatpush.msra.mxu0 %v58
    %70 = vmatpush.msra.mxu0 %v57
    %71 = vmatpush.msra.mxu0 %v56
    %72 = vmatpush.msra.mxu0 %v55
    %73 = vmatpush.msra.mxu0 %v54
    %74 = vmatpush.msra.mxu0 %v53
    %75 = vmatpush.msra.mxu0 %v52
    %76 = vmatpush.msra.mxu0 %v51
    %77 = vmatpush.msra.mxu0 %v50
    %78 = vmatpush.msra.mxu0 %v49
    %79 = vmatpush.msra.mxu0 %v48
    %80 = vmatpush.msra.mxu0 %v47
    %81 = vmatpush.msra.mxu0 %v46
    %82 = vmatmul.f32.gmra.mxu0 %v45
    %v83 = vpop.f32.mrf.mxu0
    %v84 = vadd.f32 %v64, %v83
    %85 = vdwg.mxu0
    %86 = vst [vmem:[#allocation7] sm:$0xff] %v84
    // Predicated region
    $region22: #{tpu_custom_call.1} parent=1 // pred_check
      _
    $region23: #{tpu_custom_call.1} parent=1 // pred_check_branch
      %88 = sbr.rel (0) target = $region25
    $region24: #{tpu_custom_call.1} parent=1 // pred_region
      %90 = vsyncadd [#allocation4], 0
      %s92 = sshll.u32 [#allocation7], 4
      %s93 = int_to_ptr.vmem [resolvable:$true] %s92
      %s94 = sshll.u32 %s3, 4
      %s95 = int_to_ptr.hbm [resolvable:$true] %s94
      %97 = dma.vmem_to_hbm [thread:$0]  %s93, 128, %s95, [#allocation4]
    $region25: #{tpu_custom_call.1} parent=1 // pred_fallthru
      _
    // Predicated region
    $region26: #{tpu_custom_call.1} parent=1 // pred_check
      _
    $region27: #{tpu_custom_call.1} parent=1 // pred_check_branch
      %99 = sbr.rel (0) target = $region29
    $region28: #{tpu_custom_call.1} parent=1 // pred_region
      %101 = dma.done [#allocation4], 128
    $region29: #{tpu_custom_call.1} parent=1 // pred_fallthru
      _
    %102 = vsyncpa [#allocation3], 1
    %103 = vsyncpa [#allocation6], 1
    %104 = vsyncpa [#allocation4], 1

</llo_original>
